<compile_context>
chip_gen: v7x
topology: tpu7x:2x2x1
jax: 0.10.0
libtpu: 0.0.40
codegen_flags: <defaults>
</compile_context>

<pallas_src>
import functools

import jax
import jax.numpy as jnp
from jax.experimental import pallas as pl
from jax.experimental.pallas import tpu as pltpu

# ---- constants mirroring the PyTorch module -------------------------------
CLASS_WEIGHT_MULTIPLIERS = {'coast_1s': 1.5}
PREDICTION_TASKS = ['coast_1s']
TASK_WEIGHTS = {'coast_1s': 1.0}

_LANES = 128              # vreg lane width
_SUBLANES = 8             # f32 sublane count -> (8,128) tile
_MAX_BLOCK_ROWS = 2048    # (2048,128) f32 tile = 1 MiB/input; 2 inputs x 2 buffers ~= 4 MiB
_FAST_PATH_MIN_ELEMS = 4096  # below this, a standalone pallas_call is launch-latency bound


# ---- Pallas kernel: per-block partial sums of weighted BCE-with-logits ------
def _bce_block_kernel(pred_ref, tgt_ref, out_ref, *,
                      pos_weight, n_valid, block_rows, needs_mask):
    """One (block_rows, 128) f32 tile per grid step; writes an (8,128) partial-sum tile.

    PyTorch BCEWithLogitsLoss(pos_weight=w) per element:
        l = w*y*softplus(-x) + (1-y)*softplus(x)
    With softplus(x) = x + softplus(-x):
        l = (1 + (w-1)*y) * softplus(-x) + (1-y)*x          (supports soft labels y)
    softplus(-x) computed once, numerically stable, no logaddexp guard selects.
    """
    x = pred_ref[...].astype(jnp.float32)
    y = tgt_ref[...].astype(jnp.float32)

    sp_neg = jnp.maximum(-x, 0.0) + jnp.log1p(jnp.exp(-jnp.abs(x)))
    elem = (1.0 + (pos_weight - 1.0) * y) * sp_neg + (1.0 - y) * x

    def vpsum(e):
        # Fold rows onto an (8,128) vreg tile: pure VPU vreg adds, no XLU cross-lane work.
        return jnp.sum(e.reshape(-1, _SUBLANES, _LANES), axis=0)

    if needs_mask:
        pid = pl.program_id(0)
        last = pl.num_programs(0) - 1

        @pl.when(pid != last)
        def _interior():
            out_ref[0] = vpsum(elem)

        @pl.when(pid == last)
        def _tail():
            # Only the final block carries padded / out-of-range elements.
            # NOTE: int32 index math -> valid for n_valid < ~2.1e9 elements.
            row = jax.lax.broadcasted_iota(jnp.int32, elem.shape, 0)
            lane = jax.lax.broadcasted_iota(jnp.int32, elem.shape, 1)
            thr = n_valid - pid * (block_rows * _LANES)   # valid elements in this block
            mask = (row * _LANES + lane) < thr
            out_ref[0] = vpsum(jnp.where(mask, elem, 0.0))
    else:
        out_ref[0] = vpsum(elem)


# ---- plain-JAX path (same math) ---------------------------------------------
def _bce_jax_mean(x, y, w):
    x = x.astype(jnp.float32)
    y = y.astype(jnp.float32)
    sp_neg = jnp.maximum(-x, 0.0) + jnp.log1p(jnp.exp(-jnp.abs(x)))
    return jnp.mean((1.0 + (w - 1.0) * y) * sp_neg + (1.0 - y) * x)


# ---- dispatcher / wrapper ----------------------------------------------------
def _bce_with_logits_mean(pred_1d, tgt_1d, pos_weight, *,
                          min_pallas_elems=_FAST_PATH_MIN_ELEMS,
                          max_block_rows=_MAX_BLOCK_ROWS):
    """pred_1d: (B,) float logits; tgt_1d: (B,) labels in [0,1]. Returns scalar f32 mean loss."""
    B = int(pred_1d.shape[0])
    pred = pred_1d.astype(jnp.float32)   # no-op when already f32
    tgt = tgt_1d.astype(jnp.float32)

    # Small-batch fast path: launch latency dominates; a standalone kernel cannot win here.
    if B < max(min_pallas_elems, _SUBLANES * _LANES):
        return _bce_jax_mean(pred, tgt, float(pos_weight))

    rows = pl.cdiv(B, _LANES)            # rows of the lane-dense (rows, 128) view
    B128 = rows * _LANES
    if B128 != B:
        # TODO(synk): push this residual <128-element tail padding into the data pipeline;
        # at call time it still costs a full-array copy in XLA.
        pred = jnp.pad(pred, (0, B128 - B))
        tgt = jnp.pad(tgt, (0, B128 - B))
    pred2d = pred.reshape(rows, _LANES)  # copy-free reshape in row-major layout
    tgt2d = tgt.reshape(rows, _LANES)

    # Block rows: largest multiple of 8 that is <= rows and <= max_block_rows.
    block_rows = min(int(max_block_rows), (rows // _SUBLANES) * _SUBLANES)
    num_blocks = pl.cdiv(rows, block_rows)
    # Mask needed iff the grid covers more elements than the true batch (tail pad or ragged
    # last block).  Padded x=0 elements would otherwise each contribute softplus(0)=ln(2).
    needs_mask = (num_blocks * block_rows * _LANES != B)

    kernel = functools.partial(
        _bce_block_kernel,
        pos_weight=float(pos_weight),
        n_valid=B,
        block_rows=block_rows,
        needs_mask=needs_mask,
    )

    partials = pl.pallas_call(
        kernel,
        out_shape=jax.ShapeDtypeStruct((num_blocks, _SUBLANES, _LANES), jnp.float32),
        grid=(num_blocks,),
        in_specs=[
            pl.BlockSpec((block_rows, _LANES), lambda i: (i, 0)),   # logits f32
            pl.BlockSpec((block_rows, _LANES), lambda i: (i, 0)),   # labels f32
        ],
        out_specs=pl.BlockSpec((1, _SUBLANES, _LANES), lambda i: (i, 0, 0)),
        compiler_params=pltpu.CompilerParams(dimension_semantics=("parallel",)),
    )(pred2d, tgt2d)

    # Single tiny cross-lane reduce + normalize outside the kernel.
    return jnp.sum(partials) / jnp.float32(B)


# ---- MultiTaskLoss equivalent ----------------------------------------------
class MultiTaskLossPallas:
    """Multi-task loss with weighted BCE (Pallas TPU backend)."""

    def __init__(self, class_weights: dict):
        self.task_weights = TASK_WEIGHTS
        self.pos_weights = {}
        for task_name in PREDICTION_TASKS:
            if task_name in class_weights:
                base_pos_weight = class_weights[task_name][1]
                multiplier = CLASS_WEIGHT_MULTIPLIERS.get(task_name, 1.0)
                adjusted_pos_weight = base_pos_weight * multiplier
                adjusted_pos_weight = max(adjusted_pos_weight,
                                          class_weights[task_name][0])
                self.pos_weights[task_name] = float(adjusted_pos_weight)
            else:
                self.pos_weights[task_name] = 1.0  # BCEWithLogitsLoss default

    def __call__(self, predictions: dict, targets: dict) -> dict:
        losses = {}
        total_loss = jnp.float32(0.0)
        for task_name in PREDICTION_TASKS:
            if task_name in predictions and task_name in targets:
                pred = predictions[task_name]
                if pred.ndim > 0 and pred.shape[-1] == 1:   # torch .squeeze(-1) semantics
                    pred = jnp.squeeze(pred, axis=-1)
                target = targets[task_name]
                task_loss = _bce_with_logits_mean(
                    pred.reshape(-1),
                    target.reshape(-1),
                    self.pos_weights[task_name],
                )
                losses[f'loss_{task_name}'] = task_loss
                task_weight = self.task_weights.get(task_name, 1.0)
                total_loss = total_loss + task_weight * task_loss
        losses['loss_total'] = total_loss
        return losses


# ---- pure-JAX reference (independent formulation) ----------------------------
def _ref_bce(pred_1d, tgt_1d, w):
    x = pred_1d.astype(jnp.float32)
    y = tgt_1d.astype(jnp.float32)
    sp_pos = jnp.logaddexp(0.0, x)
    sp_neg = jnp.logaddexp(0.0, -x)
    return jnp.mean(w * y * sp_neg + (1.0 - y) * sp_pos)


if __name__ == "__main__":
    key = jax.random.PRNGKey(0)
    k1, k2, k3, k4, k5, k6 = jax.random.split(key, 6)

    # pos_weight = max(2.0 * 1.5, 1.0) = 3.0
    class_weights = {'coast_1s': (1.0, 2.0)}
    loss_mod = MultiTaskLossPallas(class_weights)
    W = loss_mod.pos_weights['coast_1s']

    # --- module-level demo (Pallas path, B % 128 == 0 -> copy-free layout) ---
    B = 4096
    logits = jax.random.normal(k1, (B, 1), dtype=jnp.float32)
    labels = (jax.random.uniform(k2, (B,)) > 0.7).astype(jnp.float32)
    losses = loss_mod({'coast_1s': logits}, {'coast_1s': labels})
    jax.block_until_ready(losses['loss_total'])
    ref = _ref_bce(logits.reshape(-1), labels, W)
    assert jnp.allclose(losses['loss_coast_1s'], ref, rtol=1e-5, atol=1e-5), (
        losses['loss_coast_1s'], ref)
    assert jnp.allclose(losses['loss_total'], ref, rtol=1e-5, atol=1e-5)

    # --- Pallas path, single block, no mask ---
    B1 = 2048
    x1 = jax.random.normal(k3, (B1,), dtype=jnp.float32)
    y1 = (jax.random.uniform(k4, (B1,)) > 0.5).astype(jnp.float32)
    o1 = _bce_with_logits_mean(x1, y1, W, min_pallas_elems=0)
    jax.block_until_ready(o1)
    assert jnp.allclose(o1, _ref_bce(x1, y1, W), rtol=1e-5, atol=1e-5), o1

    # --- Pallas path, multi-block "parallel" grid, no mask (small block for test) ---
    o1b = _bce_with_logits_mean(x1, y1, W, min_pallas_elems=0, max_block_rows=8)
    jax.block_until_ready(o1b)
    assert jnp.allclose(o1b, _ref_bce(x1, y1, W), rtol=1e-5, atol=1e-5), o1b

    # --- Pallas path, ragged last block + sub-128 tail (exercises gated mask) ---
    B2 = 1200
    x2 = jax.random.normal(k5, (B2,), dtype=jnp.float32)
    y2 = (jax.random.uniform(k6, (B2,)) > 0.3).astype(jnp.float32)
    o2 = _bce_with_logits_mean(x2, y2, W, min_pallas_elems=0, max_block_rows=8)
    jax.block_until_ready(o2)
    assert jnp.allclose(o2, _ref_bce(x2, y2, W), rtol=1e-5, atol=1e-5), o2

    # --- small-batch fast path (plain JAX) ---
    B3 = 256
    x3 = x1[:B3]
    y3 = y1[:B3]
    o3 = _bce_with_logits_mean(x3, y3, W)
    jax.block_until_ready(o3)
    assert jnp.allclose(o3, _ref_bce(x3, y3, W), rtol=1e-5, atol=1e-5), o3

    print("KERNEL_OK")
</pallas_src>

<mosaic_0001>
module attributes {stable_mosaic.version = 11 : i64} {
  func.func @_bce_block_kernel(%arg0: i32, %arg1: memref<32x128xf32, #tpu.memory_space<vmem>>, %arg2: memref<32x128xf32, #tpu.memory_space<vmem>>, %arg3: memref<1x8x128xf32, #tpu.memory_space<vmem>>) attributes {dimension_semantics = [#tpu.dimension_semantics<parallel>], iteration_bounds = array<i64: 1>, scalar_prefetch = 0 : i64, scratch_operands = 0 : i64, tpu.core_type = #tpu.core_type<tc>, window_params = [{transform_indices = @transform_0, window_bounds = array<i64: 32, 128>}, {transform_indices = @transform_1, window_bounds = array<i64: 32, 128>}, {transform_indices = @transform_2, window_bounds = array<i64: 1, 8, 128>}]} {
    %c0 = arith.constant 0 : index
    %c0_0 = arith.constant 0 : index
    %0 = vector.load %arg1[%c0, %c0_0] : memref<32x128xf32, #tpu.memory_space<vmem>>, vector<32x128xf32>
    %c0_1 = arith.constant 0 : index
    %c0_2 = arith.constant 0 : index
    %1 = vector.load %arg2[%c0_1, %c0_2] : memref<32x128xf32, #tpu.memory_space<vmem>>, vector<32x128xf32>
    %cst = arith.constant 0.000000e+00 : f32
    %2 = vector.broadcast %cst : f32 to vector<32x128xf32>
    %3 = arith.subf %2, %0 : vector<32x128xf32>
    %cst_3 = arith.constant 0.000000e+00 : f32
    %4 = vector.broadcast %cst_3 : f32 to vector<32x128xf32>
    %5 = arith.maximumf %3, %4 : vector<32x128xf32>
    %6 = math.absf %0 : vector<32x128xf32>
    %cst_4 = arith.constant 0.000000e+00 : f32
    %7 = vector.broadcast %cst_4 : f32 to vector<32x128xf32>
    %8 = arith.subf %7, %6 : vector<32x128xf32>
    %9 = math.exp %8 : vector<32x128xf32>
    %10 = math.log1p %9 : vector<32x128xf32>
    %11 = arith.addf %5, %10 : vector<32x128xf32>
    %cst_5 = arith.constant 2.000000e+00 : f32
    %12 = vector.broadcast %cst_5 : f32 to vector<32x128xf32>
    %13 = arith.mulf %12, %1 : vector<32x128xf32>
    %cst_6 = arith.constant 1.000000e+00 : f32
    %14 = vector.broadcast %cst_6 : f32 to vector<32x128xf32>
    %15 = arith.addf %14, %13 : vector<32x128xf32>
    %16 = arith.mulf %15, %11 : vector<32x128xf32>
    %cst_7 = arith.constant 1.000000e+00 : f32
    %17 = vector.broadcast %cst_7 : f32 to vector<32x128xf32>
    %18 = arith.subf %17, %1 : vector<32x128xf32>
    %19 = arith.mulf %18, %0 : vector<32x128xf32>
    %20 = arith.addf %16, %19 : vector<32x128xf32>
    %21 = vector.shape_cast %20 : vector<32x128xf32> to vector<4x8x128xf32>
    %cst_8 = arith.constant dense<0.000000e+00> : vector<8x128xf32>
    %22 = vector.multi_reduction <add>, %21, %cst_8 [0] : vector<4x8x128xf32> to vector<8x128xf32>
    %c0_9 = arith.constant 0 : index
    %c0_10 = arith.constant 0 : index
    %c0_11 = arith.constant 0 : index
    %23 = vector.load %arg3[%c0_9, %c0_10, %c0_11] : memref<1x8x128xf32, #tpu.memory_space<vmem>>, vector<1x8x128xf32>
    %24 = vector.shape_cast %23 : vector<1x8x128xf32> to vector<8x128xf32>
    %25 = vector.shape_cast %22 : vector<8x128xf32> to vector<1x8x128xf32>
    tpu.vector_store %arg3[%c0_9, %c0_10, %c0_11], %25 {strides = array<i32>} : memref<1x8x128xf32, #tpu.memory_space<vmem>>, vector<1x8x128xf32>,
    return
  }
  func.func @transform_0(%arg0: i32) -> (i32, i32) {
    %c0_i32 = arith.constant 0 : i32
    %c0_i32_0 = arith.constant 0 : i32
    return %arg0, %c0_i32 : i32, i32
  }
  func.func @transform_1(%arg0: i32) -> (i32, i32) {
    %c0_i32 = arith.constant 0 : i32
    %c0_i32_0 = arith.constant 0 : i32
    return %arg0, %c0_i32 : i32, i32
  }
  func.func @transform_2(%arg0: i32) -> (i32, i32, i32) {
    %c0_i32 = arith.constant 0 : i32
    %c0_i32_0 = arith.constant 0 : i32
    %c0_i32_1 = arith.constant 0 : i32
    return %arg0, %c0_i32, %c0_i32_0 : i32, i32, i32
  }
}

</mosaic_0001>

<llo_original>
// kernel: tpu_custom_call.1
$region0: #{tpu_custom_call.1}
  #allocation0 [shape = 'u32[]', space=smem, size = 0x4, offset = 0x4, fixed_abs, tag = 'smem constant byte address 0x4 - core index']
  #allocation1 [shape = 'u32[144,128]{1,0:T(1,128)}', space=vmem, size = 0x12000, scoped, tag = 'internal scratch']
  %s0 = inlined_call_operand.hbm [shape: f32[32,128], index: 0, kind: input, shape index: {}]
  %s1 = inlined_call_operand.hbm [shape: f32[32,128], index: 1, kind: input, shape index: {}]
  %s2 = inlined_call_operand.hbm [shape: f32[1,8,128], index: 2, kind: output, shape index: {}]
  %s3 = sld [smem:[#allocation0]]
  $region26: #{tpu_custom_call.1} parent=0
    _
  %s5 = ssub.s32 1, %s3
  %s6 = scalar_select 0, %s5, %s3
  $region1: #{tpu_custom_call.1} parent=0
    #allocation2 [shape = 'u8[16384]{0}', space=vmem, size = 0x4000, scoped, tag = 'input window, operand 0, single buffered']
    #allocation3 [shape = 's32[1]{0}', space=sflag, size = 0x4, scoped, tag = 'scoped memory for tpu_custom_call.1']
    #allocation4 [shape = 's32[1]{0}', space=sflag, size = 0x4, scoped, tag = 'scoped memory for tpu_custom_call.1']
    #allocation5 [shape = 'u8[16384]{0}', space=vmem, size = 0x4000, scoped, tag = 'input window, operand 1, single buffered']
    #allocation6 [shape = 's32[1]{0}', space=sflag, size = 0x4, scoped, tag = 'scoped memory for tpu_custom_call.1']
    #allocation7 [shape = 'u8[4096]{0}', space=vmem, size = 0x1000, scoped, tag = 'output window, operand 0, single buffered']
    %7 = vsyncpa [#allocation3], 0
    %8 = vsyncpa [#allocation6], 0
    %9 = vsyncpa [#allocation4], 0
    // Predicated region
    $region2: #{tpu_custom_call.1} parent=1 // pred_check
      _
    $region3: #{tpu_custom_call.1} parent=1 // pred_check_branch
      %11 = sbr.rel (0) target = $region5
    $region4: #{tpu_custom_call.1} parent=1 // pred_region
      %s13 = ssub.s32 512, 512
      %14 = vsyncadd [#allocation3], %s13
      %s15 = sshll.u32 [#allocation2], 4
      %s16 = int_to_ptr.vmem [resolvable:$true] %s15
      %21 = dma.hbm_to_vmem [thread:$0]  %s0, 512, %s16, [#allocation3], 128, 128, 8
    $region5: #{tpu_custom_call.1} parent=1 // pred_fallthru
      _
    // Predicated region
    $region6: #{tpu_custom_call.1} parent=1 // pred_check
      _
    $region7: #{tpu_custom_call.1} parent=1 // pred_check_branch
      %23 = sbr.rel (0) target = $region9
    $region8: #{tpu_custom_call.1} parent=1 // pred_region
      %s25 = ssub.s32 512, 512
      %26 = vsyncadd [#allocation6], %s25
      %s27 = sshll.u32 [#allocation5], 4
      %s28 = int_to_ptr.vmem [resolvable:$true] %s27
      %33 = dma.hbm_to_vmem [thread:$0]  %s1, 512, %s28, [#allocation6], 128, 128, 8
    $region9: #{tpu_custom_call.1} parent=1 // pred_fallthru
      _
    // Predicated region
    $region10: #{tpu_custom_call.1} parent=1 // pred_check
      _
    $region11: #{tpu_custom_call.1} parent=1 // pred_check_branch
      %35 = sbr.rel (0) target = $region13
    $region12: #{tpu_custom_call.1} parent=1 // pred_region
      %36 = dma.done [#allocation3], 512
    $region13: #{tpu_custom_call.1} parent=1 // pred_fallthru
      _
    // Predicated region
    $region14: #{tpu_custom_call.1} parent=1 // pred_check
      _
    $region15: #{tpu_custom_call.1} parent=1 // pred_check_branch
      %38 = sbr.rel (0) target = $region17
    $region16: #{tpu_custom_call.1} parent=1 // pred_region
      %39 = dma.done [#allocation6], 512
    $region17: #{tpu_custom_call.1} parent=1 // pred_fallthru
      _
    %v40 = vld [vmem:[#allocation2] sm:$0xff]
    %v41 = vld [vmem:[#allocation2 + $0x8] sm:$0xff]
    %v42 = vld [vmem:[#allocation2 + $0x10] sm:$0xff]
    %v43 = vld [vmem:[#allocation2 + $0x18] sm:$0xff]
    %v44 = vld [vmem:[#allocation5] sm:$0xff]
    %v45 = vld [vmem:[#allocation5 + $0x8] sm:$0xff]
    %v46 = vld [vmem:[#allocation5 + $0x10] sm:$0xff]
    %v47 = vld [vmem:[#allocation5 + $0x18] sm:$0xff]
    %v48 = vsub.f32 0.0, %v40
    %v49 = vsub.f32 0.0, %v41
    %v50 = vsub.f32 0.0, %v42
    %v51 = vsub.f32 0.0, %v43
    %v52 = vmax.f32 %v48, 0.0
    %v53 = vmax.f32 %v49, 0.0
    %v54 = vmax.f32 %v50, 0.0
    %v55 = vmax.f32 %v51, 0.0
    %v56 = vand.u32 2147483647, %v40
    %v57 = vand.u32 2147483647, %v41
    %v58 = vand.u32 2147483647, %v42
    %v59 = vand.u32 2147483647, %v43
    %v60 = vsub.f32 0.0, %v56
    %v61 = vsub.f32 0.0, %v57
    %v62 = vsub.f32 0.0, %v58
    %v63 = vsub.f32 0.0, %v59
    %v64 = vmul.f32 %v60, 1.442695
    %v65 = vpow.pop %v64
    %v66 = vmul.f32 %v61, 1.442695
    %v67 = vpow.pop %v66
    %v68 = vmul.f32 %v62, 1.442695
    %v69 = vpow.pop %v68
    %v70 = vmul.f32 %v63, 1.442695
    %v71 = vpow.pop %v70
    %v72 = vadd.f32 %v65, 1.0
    %v73 = vlog2.pop %v72
    %v74 = vmul.f32 %v73, 0.6931472
    %v75 = vmul.f32 -0.5, %v65
    %v76 = vadd.f32 %v75, 1.0
    %v77 = vmul.f32 %v76, %v65
    %v78 = vand.u32 2147483647, %v65
    %vm79 = vcmp.lt.f32.partialorder %v78, 0.0004427343
    %v80 = vsel %vm79, %v77, %v74
    %v81 = vadd.f32 %v67, 1.0
    %v82 = vlog2.pop %v81
    %v83 = vmul.f32 %v82, 0.6931472
    %v84 = vmul.f32 -0.5, %v67
    %v85 = vadd.f32 %v84, 1.0
    %v86 = vmul.f32 %v85, %v67
    %v87 = vand.u32 2147483647, %v67
    %vm88 = vcmp.lt.f32.partialorder %v87, 0.0004427343
    %v89 = vsel %vm88, %v86, %v83
    %v90 = vadd.f32 %v69, 1.0
    %v91 = vlog2.pop %v90
    %v92 = vmul.f32 %v91, 0.6931472
    %v93 = vmul.f32 -0.5, %v69
    %v94 = vadd.f32 %v93, 1.0
    %v95 = vmul.f32 %v94, %v69
    %v96 = vand.u32 2147483647, %v69
    %vm97 = vcmp.lt.f32.partialorder %v96, 0.0004427343
    %v98 = vsel %vm97, %v95, %v92
    %v99 = vadd.f32 %v71, 1.0
    %v100 = vlog2.pop %v99
    %v101 = vmul.f32 %v100, 0.6931472
    %v102 = vmul.f32 -0.5, %v71
    %v103 = vadd.f32 %v102, 1.0
    %v104 = vmul.f32 %v103, %v71
    %v105 = vand.u32 2147483647, %v71
    %vm106 = vcmp.lt.f32.partialorder %v105, 0.0004427343
    %v107 = vsel %vm106, %v104, %v101
    %v108 = vadd.f32 %v52, %v80
    %v109 = vadd.f32 %v53, %v89
    %v110 = vadd.f32 %v54, %v98
    %v111 = vadd.f32 %v55, %v107
    %v112 = vmul.f32 %v44, 2.0
    %v113 = vmul.f32 %v45, 2.0
    %v114 = vmul.f32 %v46, 2.0
    %v115 = vmul.f32 %v47, 2.0
    %v116 = vadd.f32 %v112, 1.0
    %v117 = vadd.f32 %v113, 1.0
    %v118 = vadd.f32 %v114, 1.0
    %v119 = vadd.f32 %v115, 1.0
    %v120 = vmul.f32 %v116, %v108
    %v121 = vmul.f32 %v117, %v109
    %v122 = vmul.f32 %v118, %v110
    %v123 = vmul.f32 %v119, %v111
    %v124 = vsub.f32 1.0, %v44
    %v125 = vsub.f32 1.0, %v45
    %v126 = vsub.f32 1.0, %v46
    %v127 = vsub.f32 1.0, %v47
    %v128 = vmul.f32 %v124, %v40
    %v129 = vmul.f32 %v125, %v41
    %v130 = vmul.f32 %v126, %v42
    %v131 = vmul.f32 %v127, %v43
    %v132 = vadd.f32 %v120, %v128
    %v133 = vadd.f32 %v121, %v129
    %v134 = vadd.f32 %v122, %v130
    %v135 = vadd.f32 %v123, %v131
    %v136 = vadd.f32 %v132, %v133
    %v137 = vadd.f32 %v136, %v134
    %v138 = vadd.f32 %v137, %v135
    %139 = vst [vmem:[#allocation7] sm:$0xff] %v138
    // Predicated region
    $region18: #{tpu_custom_call.1} parent=1 // pred_check
      _
    $region19: #{tpu_custom_call.1} parent=1 // pred_check_branch
      %141 = sbr.rel (0) target = $region21
    $region20: #{tpu_custom_call.1} parent=1 // pred_region
      %s143 = ssub.s32 128, 128
      %144 = vsyncadd [#allocation4], %s143
      %s146 = sshll.u32 [#allocation7], 4
      %s147 = int_to_ptr.vmem [resolvable:$true] %s146
      %149 = dma.vmem_to_hbm [thread:$0]  %s147, 128, %s2, [#allocation4]
    $region21: #{tpu_custom_call.1} parent=1 // pred_fallthru
      _
    // Predicated region
    $region22: #{tpu_custom_call.1} parent=1 // pred_check
      _
    $region23: #{tpu_custom_call.1} parent=1 // pred_check_branch
      %151 = sbr.rel (0) target = $region25
    $region24: #{tpu_custom_call.1} parent=1 // pred_region
      %152 = dma.done [#allocation4], 128
    $region25: #{tpu_custom_call.1} parent=1 // pred_fallthru
      _
    %153 = vsyncpa [#allocation3], 1
    %154 = vsyncpa [#allocation6], 1
    %155 = vsyncpa [#allocation4], 1

</llo_original>
